<compile_context>
chip_gen: v6e
topology: v6e:2x2x1
jax: 0.10.0
libtpu: 0.0.40
codegen_flags: <defaults>
</compile_context>

<pallas_src>
import functools

import jax
import jax.numpy as jnp
import numpy as np
from jax.experimental import pallas as pl
from jax.experimental.pallas import tpu as pltpu

_LANE = 128          # TPU lane width (hidden + output dims padded to this)
_TILE_M_MAX = 2048   # max rows per grid step (multiple of 8 = f32 sublane)
_TILE_M_MIN = 256    # below this, extra grid steps are pure overhead


def _round_up(x, m):
    return ((x + m - 1) // m) * m


def _choose_tile_m(M):
    """Pick the M tile: as large as possible (grid-step overhead dominates at
    these shapes), but keep >= 2 grid steps on large batches so the "parallel"
    axis can be sharded across v7x's two TensorCores."""
    if M <= _TILE_M_MAX:
        half = _round_up(-(-M // 2), 8)          # round_up(cdiv(M, 2), 8)
        tm = max(half, _TILE_M_MIN)
        if tm >= M:
            return M                             # single whole-array block
        return tm
    return _TILE_M_MAX


# ----------------------------- Pallas kernels -----------------------------

def _matmul_relu_matmul_kernel(x_ref, wa_ref, ba_ref, wb_ref, bb_ref, o_ref):
    # o = relu(x @ Wa + ba) @ Wb + bb        (all lane-padded, f32 accumulation)
    # Fast path:  x = im2col patches,  Wa = folded conv+linear1 weight.
    # Fallback:   x = relayouted conv rows,  Wa = padded linear1 weight.
    h = (
        jnp.dot(x_ref[...], wa_ref[...], preferred_element_type=jnp.float32)
        + ba_ref[...]
    )
    h = jnp.maximum(h, 0.0)
    o_ref[...] = (
        jnp.dot(h.astype(wb_ref.dtype), wb_ref[...],
                preferred_element_type=jnp.float32)
        + bb_ref[...]
    )


def _conv_matmul_kernel(p_ref, w_ref, b_ref, o_ref):
    # Fallback path only (Ho*Wo > 1): conv as patches @ Wc + bc
    o_ref[...] = (
        jnp.dot(p_ref[...], w_ref[...], preferred_element_type=jnp.float32)
        + b_ref[...]
    )


# ------------------------------ pallas wrappers ----------------------------

def fused_mlp(x, wa, ba, wb, bb):
    """relu(x @ wa + ba) @ wb + bb, tiled over rows, weights block-resident."""
    M, Kin = x.shape
    Cp = wa.shape[1]
    Ap = wb.shape[1]
    tm = _choose_tile_m(M)
    grid = (pl.cdiv(M, tm),)
    return pl.pallas_call(
        _matmul_relu_matmul_kernel,
        out_shape=jax.ShapeDtypeStruct((M, Ap), jnp.float32),
        grid_spec=pltpu.PrefetchScalarGridSpec(
            num_scalar_prefetch=0,
            grid=grid,
            in_specs=[
                pl.BlockSpec((tm, Kin), lambda i: (i, 0)),   # rows: tiled over M
                pl.BlockSpec((Kin, Cp), lambda i: (0, 0)),   # weights resident
                pl.BlockSpec((1, Cp), lambda i: (0, 0)),
                pl.BlockSpec((Cp, Ap), lambda i: (0, 0)),
                pl.BlockSpec((1, Ap), lambda i: (0, 0)),
            ],
            out_specs=pl.BlockSpec((tm, Ap), lambda i: (i, 0)),  # lane-dense (Ap=128)
        ),
        compiler_params=pltpu.CompilerParams(
            dimension_semantics=("parallel",)),    # megacore split over M on v7x
    )(x, wa, ba, wb, bb)


def conv_matmul(patches, w, b):
    """Fallback-path conv as matmul, M-tiled (output stays C-wide for the
    subsequent NCHW relayout)."""
    M, KK = patches.shape
    C = w.shape[1]
    tm = _choose_tile_m(M)
    grid = (pl.cdiv(M, tm),)
    # TODO(synk): fallback conv output is C(=32)-lane wide (masked stores); a
    # fully lane-dense fallback would need the NCHW relayout folded in-kernel.
    return pl.pallas_call(
        _conv_matmul_kernel,
        out_shape=jax.ShapeDtypeStruct((M, C), jnp.float32),
        grid_spec=pltpu.PrefetchScalarGridSpec(
            num_scalar_prefetch=0,
            grid=grid,
            in_specs=[
                pl.BlockSpec((tm, KK), lambda i: (i, 0)),
                pl.BlockSpec((KK, C), lambda i: (0, 0)),
                pl.BlockSpec((1, C), lambda i: (0, 0)),
            ],
            out_specs=pl.BlockSpec((tm, C), lambda i: (i, 0)),
        ),
        compiler_params=pltpu.CompilerParams(
            dimension_semantics=("parallel",)),
    )(patches, w, b)


# ------------------------------ glue / model ------------------------------

def _im2col(x, k):
    """x: (N, 1, H, W) NCHW -> patches (N*Ho*Wo, k*k), rows ordered (n,ho,wo).

    Only used on the general fallback path (Ho*Wo > 1)."""
    N, _, H, W = x.shape
    Ho, Wo = H - k + 1, W - k + 1
    cols = [x[:, 0, i : i + Ho, j : j + Wo] for i in range(k) for j in range(k)]
    patches = jnp.stack(cols, axis=-1)  # (N, Ho, Wo, k*k), (kh, kw) row-major
    return patches.reshape(N * Ho * Wo, k * k)


def init_params(key, out_channels, kernel_size, actions_space):
    """Deterministic params in torch layout, uniform(-1/sqrt(fan_in))."""
    ks = jax.random.split(key, 6)
    C, K, A = out_channels, kernel_size, actions_space

    def u(k, shape, fan_in):
        bound = 1.0 / np.sqrt(fan_in)
        return jax.random.uniform(k, shape, jnp.float32, -bound, bound)

    return {
        "conv_w": u(ks[0], (C, 1, K, K), K * K),   # torch Conv2d weight layout
        "conv_b": u(ks[1], (C,), K * K),
        "w1": u(ks[2], (C, C), C),                 # torch Linear: (out, in)
        "b1": u(ks[3], (C,), C),
        "w2": u(ks[4], (A, C), C),
        "b2": u(ks[5], (A,), C),
    }


def prepare_params(params, *, dtype=jnp.float32):
    """One-time weight prep:
      * transpose torch (out,in) weights to (in,out),
      * algebraically fold conv-matmul + Linear1 (exact: both linear),
      * zero-pad hidden (C) and action (A) dims to 128 lanes (exact),
      * optionally cast MXU operands to bf16 (biases stay f32)."""
    C, _, K, _ = params["conv_w"].shape
    A = params["w2"].shape[0]
    KK = K * K
    Cp = _round_up(C, _LANE)
    Ap = _round_up(A, _LANE)

    wc = params["conv_w"].reshape(C, KK).T.astype(jnp.float32)   # (KK, C)
    bc = params["conv_b"].reshape(1, C).astype(jnp.float32)
    w1 = params["w1"].T.astype(jnp.float32)                      # (C, C)
    b1 = params["b1"].reshape(1, C).astype(jnp.float32)
    w2 = params["w2"].T.astype(jnp.float32)                      # (C, A)
    b2 = params["b2"].reshape(1, A).astype(jnp.float32)

    # Fold conv + Linear1 (valid because there is no nonlinearity between them).
    wf = wc @ w1                                                 # (KK, C)
    bf = bc @ w1 + b1                                            # (1, C)

    def pad(x, rows, cols):
        return jnp.zeros((rows, cols), jnp.float32).at[: x.shape[0], : x.shape[1]].set(x)

    return {
        # fast path (Ho == Wo == 1): relu(p @ wfp + bfp) @ w2p + b2p
        "wfp": pad(wf, KK, Cp).astype(dtype),
        "bfp": pad(bf, 1, Cp),                 # biases stay f32 (added to f32 acc)
        # fallback path (Ho*Wo > 1): conv kernel + padded MLP kernel
        "wc": wc.astype(dtype),
        "bc": bc,
        "w1p": pad(w1, C, Cp).astype(dtype),
        "b1p": pad(b1, 1, Cp),
        # shared lane-padded output head
        "w2p": pad(w2, Cp, Ap).astype(dtype),
        "b2p": pad(b2, 1, Ap),
    }


def _forward_padded(prepped, state, kernel_size):
    """Core forward.  Returns the lane-padded (M, 128) output (cols >= A are 0)."""
    K = kernel_size
    N, _, H, W = state.shape
    Ho, Wo = H - K + 1, W - K + 1
    mxu_dtype = prepped["wfp"].dtype

    if Ho == 1 and Wo == 1:
        # Fast path (intended DQN case): im2col is a plain reshape, the NCHW
        # .view(-1, C) flatten is the identity on (N,C,1,1), and conv+Linear1
        # are pre-folded, so the whole forward is ONE pallas_call.
        patches = state.reshape(N, K * K).astype(mxu_dtype)
        return fused_mlp(patches, prepped["wfp"], prepped["bfp"],
                         prepped["w2p"], prepped["b2p"])

    # General fallback (Ho*Wo > 1): reproduce PyTorch's NCHW .view(-1, C)
    # exactly (rows mix spatial/channel elements, same as torch).
    C = prepped["wc"].shape[1]
    patches = _im2col(state, K).astype(mxu_dtype)
    conv_rows = conv_matmul(patches, prepped["wc"], prepped["bc"])   # (N*Ho*Wo, C)
    # TODO(synk): the NCHW .view(-1, C) relayout stays as XLA glue; folding it
    # into the MLP kernel's index_map would require a per-row gather.
    conv_nchw = conv_rows.reshape(N, Ho, Wo, C).transpose(0, 3, 1, 2)
    x = conv_nchw.reshape(-1, C).astype(mxu_dtype)
    return fused_mlp(x, prepped["w1p"], prepped["b1p"],
                     prepped["w2p"], prepped["b2p"])


@functools.partial(jax.jit, static_argnames=("kernel_size",))
def net_forward_padded(prepped, state, *, kernel_size):
    """Hot-path API: lane-padded (M, 128) Q block; columns >= actions_space are
    exactly zero.  Downstream consumers (argmax over actions, Q(s,a) gather)
    should slice/mask lazily instead of paying a separate copy kernel."""
    return _forward_padded(prepped, state, kernel_size)


@functools.partial(jax.jit, static_argnames=("kernel_size", "actions_space"))
def net_forward(prepped, state, *, kernel_size, actions_space):
    """Exact module semantics: (N*Ho*Wo, actions_space)."""
    out_pad = _forward_padded(prepped, state, kernel_size)
    return out_pad[:, :actions_space]


def _reference_forward(params, state):
    """Pure-JAX reference (mirrors the PyTorch graph) for a sanity check."""
    C = params["conv_w"].shape[0]
    conv = jax.lax.conv_general_dilated(
        state, params["conv_w"], window_strides=(1, 1), padding="VALID",
        dimension_numbers=("NCHW", "OIHW", "NCHW"),
    ) + params["conv_b"].reshape(1, C, 1, 1)
    x = conv.reshape(-1, C)
    x = jnp.maximum(x @ params["w1"].T + params["b1"], 0.0)
    return x @ params["w2"].T + params["b2"]


if __name__ == "__main__":
    # Shapes implied by the module: single-channel image, conv collapses the
    # spatial dims (H == W == kernel_size), DQN-style action head.
    out_channels, kernel_size, actions_space = 32, 8, 4

    key = jax.random.PRNGKey(0)
    pkey, dkey = jax.random.split(key)
    params = init_params(pkey, out_channels, kernel_size, actions_space)
    prepped = prepare_params(params)                          # f32 MXU operands
    prepped_bf16 = prepare_params(params, dtype=jnp.bfloat16)  # bf16 lever (v5e)

    cases = [
        # (N, H, W): intended DQN shape -> fully fused single-kernel path
        (2, kernel_size, kernel_size),
        # training-sized replay batch -> exercises the M-tiled 2-step parallel grid
        (512, kernel_size, kernel_size),
        # general spatial shape (Ho*Wo > 1) -> fallback path, NCHW view quirk
        (2, kernel_size + 1, kernel_size + 1),
    ]

    for (N, H, W) in cases:
        state = jax.random.normal(dkey, (N, 1, H, W), jnp.float32)
        ref = _reference_forward(params, state)

        out = jax.block_until_ready(
            net_forward(prepped, state,
                        kernel_size=kernel_size, actions_space=actions_space))
        np.testing.assert_allclose(np.asarray(out), np.asarray(ref),
                                   rtol=2e-3, atol=2e-3)

        # Lane-padded hot-path output: first A columns match, padding is zero.
        out_pad = jax.block_until_ready(
            net_forward_padded(prepped, state, kernel_size=kernel_size))
        np.testing.assert_allclose(np.asarray(out_pad[:, :actions_space]),
                                   np.asarray(out), rtol=0, atol=0)
        np.testing.assert_allclose(np.asarray(out_pad[:, actions_space:]), 0.0,
                                   rtol=0, atol=1e-6)

    # Optional bf16 MXU-operand lever (f32 accumulation) — looser tolerance.
    state = jax.random.normal(dkey, (512, 1, kernel_size, kernel_size), jnp.float32)
    out_bf16 = jax.block_until_ready(
        net_forward(prepped_bf16, state,
                    kernel_size=kernel_size, actions_space=actions_space))
    np.testing.assert_allclose(np.asarray(out_bf16),
                               np.asarray(_reference_forward(params, state)),
                               rtol=5e-2, atol=3e-2)

    print("KERNEL_OK")
</pallas_src>

<mosaic_0001>
module attributes {stable_mosaic.version = 11 : i64} {
  func.func @_matmul_relu_matmul_kernel(%arg0: i32, %arg1: memref<2x64xf32, #tpu.memory_space<vmem>>, %arg2: memref<64x128xf32, #tpu.memory_space<vmem>>, %arg3: memref<1x128xf32, #tpu.memory_space<vmem>>, %arg4: memref<128x128xf32, #tpu.memory_space<vmem>>, %arg5: memref<1x128xf32, #tpu.memory_space<vmem>>, %arg6: memref<2x128xf32, #tpu.memory_space<vmem>>) attributes {dimension_semantics = [#tpu.dimension_semantics<parallel>], iteration_bounds = array<i64: 1>, scalar_prefetch = 0 : i64, scratch_operands = 0 : i64, tpu.core_type = #tpu.core_type<tc>, window_params = [{transform_indices = @transform_0, window_bounds = array<i64: 2, 64>}, {pipeline_mode = #tpu.pipeline_mode<synchronous>, transform_indices = @transform_1, window_bounds = array<i64: 64, 128>}, {pipeline_mode = #tpu.pipeline_mode<synchronous>, transform_indices = @transform_2, window_bounds = array<i64: 1, 128>}, {pipeline_mode = #tpu.pipeline_mode<synchronous>, transform_indices = @transform_3, window_bounds = array<i64: 128, 128>}, {pipeline_mode = #tpu.pipeline_mode<synchronous>, transform_indices = @transform_4, window_bounds = array<i64: 1, 128>}, {transform_indices = @transform_5, window_bounds = array<i64: 2, 128>}]} {
    %c0 = arith.constant 0 : index
    %c0_0 = arith.constant 0 : index
    %0 = vector.load %arg1[%c0, %c0_0] : memref<2x64xf32, #tpu.memory_space<vmem>>, vector<2x64xf32>
    %c0_1 = arith.constant 0 : index
    %c0_2 = arith.constant 0 : index
    %1 = vector.load %arg2[%c0_1, %c0_2] : memref<64x128xf32, #tpu.memory_space<vmem>>, vector<64x128xf32>
    %cst = arith.constant dense<0.000000e+00> : vector<2x128xf32>
    %2 = tpu.matmul %0, %1, %cst {dimension_numbers = #tpu.dot_dimension_numbers<[1], [0], [0], [1], [0, 0, 1, 1], [], []>} : vector<2x64xf32>, vector<64x128xf32>, vector<2x128xf32> -> vector<2x128xf32>
    %c0_3 = arith.constant 0 : index
    %c0_4 = arith.constant 0 : index
    %3 = vector.load %arg3[%c0_3, %c0_4] : memref<1x128xf32, #tpu.memory_space<vmem>>, vector<1x128xf32>
    %4 = vector.broadcast %3 : vector<1x128xf32> to vector<2x128xf32>
    %5 = arith.addf %2, %4 : vector<2x128xf32>
    %cst_5 = arith.constant 0.000000e+00 : f32
    %6 = vector.broadcast %cst_5 : f32 to vector<2x128xf32>
    %7 = arith.maximumf %5, %6 : vector<2x128xf32>
    %c0_6 = arith.constant 0 : index
    %c0_7 = arith.constant 0 : index
    %8 = vector.load %arg4[%c0_6, %c0_7] : memref<128x128xf32, #tpu.memory_space<vmem>>, vector<128x128xf32>
    %cst_8 = arith.constant dense<0.000000e+00> : vector<2x128xf32>
    %9 = tpu.matmul %7, %8, %cst_8 {dimension_numbers = #tpu.dot_dimension_numbers<[1], [0], [0], [1], [0, 0, 1, 1], [], []>} : vector<2x128xf32>, vector<128x128xf32>, vector<2x128xf32> -> vector<2x128xf32>
    %c0_9 = arith.constant 0 : index
    %c0_10 = arith.constant 0 : index
    %10 = vector.load %arg5[%c0_9, %c0_10] : memref<1x128xf32, #tpu.memory_space<vmem>>, vector<1x128xf32>
    %11 = vector.broadcast %10 : vector<1x128xf32> to vector<2x128xf32>
    %12 = arith.addf %9, %11 : vector<2x128xf32>
    %c0_11 = arith.constant 0 : index
    %c0_12 = arith.constant 0 : index
    %13 = vector.load %arg6[%c0_11, %c0_12] : memref<2x128xf32, #tpu.memory_space<vmem>>, vector<2x128xf32>
    tpu.vector_store %arg6[%c0_11, %c0_12], %12 {strides = array<i32>} : memref<2x128xf32, #tpu.memory_space<vmem>>, vector<2x128xf32>,
    return
  }
  func.func @transform_0(%arg0: i32) -> (i32, i32) {
    %c0_i32 = arith.constant 0 : i32
    %c0_i32_0 = arith.constant 0 : i32
    return %arg0, %c0_i32 : i32, i32
  }
  func.func @transform_1(%arg0: i32) -> (i32, i32) {
    %c0_i32 = arith.constant 0 : i32
    %c0_i32_0 = arith.constant 0 : i32
    %c0_i32_1 = arith.constant 0 : i32
    return %c0_i32, %c0_i32_0 : i32, i32
  }
  func.func @transform_2(%arg0: i32) -> (i32, i32) {
    %c0_i32 = arith.constant 0 : i32
    %c0_i32_0 = arith.constant 0 : i32
    %c0_i32_1 = arith.constant 0 : i32
    return %c0_i32, %c0_i32_0 : i32, i32
  }
  func.func @transform_3(%arg0: i32) -> (i32, i32) {
    %c0_i32 = arith.constant 0 : i32
    %c0_i32_0 = arith.constant 0 : i32
    %c0_i32_1 = arith.constant 0 : i32
    return %c0_i32, %c0_i32_0 : i32, i32
  }
  func.func @transform_4(%arg0: i32) -> (i32, i32) {
    %c0_i32 = arith.constant 0 : i32
    %c0_i32_0 = arith.constant 0 : i32
    %c0_i32_1 = arith.constant 0 : i32
    return %c0_i32, %c0_i32_0 : i32, i32
  }
  func.func @transform_5(%arg0: i32) -> (i32, i32) {
    %c0_i32 = arith.constant 0 : i32
    %c0_i32_0 = arith.constant 0 : i32
    return %arg0, %c0_i32 : i32, i32
  }
}

</mosaic_0001>

<llo_original>
// kernel: net_forward.1
$region0: #{net_forward.1}
  #allocation0 [shape = 'u32[]', space=smem, size = 0x4, offset = 0x4, fixed_abs, tag = 'smem constant byte address 0x4 - core index']
  #allocation1 [shape = 'u32[144,128]{1,0:T(1,128)}', space=vmem, size = 0x12000, scoped, tag = 'internal scratch']
  %s0 = inlined_call_operand.vmem [shape: f32[2,64], index: 0, kind: input, shape index: {}]
  %s1 = inlined_call_operand.hbm [shape: f32[64,128], index: 1, kind: input, shape index: {}]
  %s2 = inlined_call_operand.vmem [shape: f32[1,128], index: 2, kind: input, shape index: {}]
  %s3 = inlined_call_operand.hbm [shape: f32[128,128], index: 3, kind: input, shape index: {}]
  %s4 = inlined_call_operand.vmem [shape: f32[1,128], index: 4, kind: input, shape index: {}]
  %s5 = inlined_call_operand.hbm [shape: f32[2,128], index: 5, kind: output, shape index: {}]
  %s6 = sld [smem:[#allocation0]]
  $region38: #{net_forward.1} parent=0
    _
  %s8 = ssub.s32 1, %s6
  %s9 = scalar_select 0, %s8, %s6
  $region1: #{net_forward.1} parent=0
    #allocation2 [shape = 'u8[32768]{0}', space=vmem, size = 0x8000, scoped, tag = 'input window, operand 1, single buffered']
    #allocation3 [shape = 's32[1]{0}', space=sflag, size = 0x4, scoped, tag = 'scoped memory for net_forward.1']
    #allocation4 [shape = 's32[1]{0}', space=sflag, size = 0x4, scoped, tag = 'scoped memory for net_forward.1']
    #allocation5 [shape = 'u8[65536]{0}', space=vmem, size = 0x10000, scoped, tag = 'input window, operand 3, single buffered']
    #allocation6 [shape = 's32[1]{0}', space=sflag, size = 0x4, scoped, tag = 'scoped memory for net_forward.1']
    #allocation7 [shape = 'u8[1024]{0}', space=vmem, size = 0x400, scoped, tag = 'output window, operand 0, single buffered']
    %10 = vsyncpa [#allocation3], 0
    %11 = vsyncpa [#allocation6], 0
    %12 = vsyncpa [#allocation4], 0
    // Predicated region
    $region2: #{net_forward.1} parent=1 // pred_check
      _
    $region3: #{net_forward.1} parent=1 // pred_check_branch
      %14 = sbr.rel (0) target = $region5
    $region4: #{net_forward.1} parent=1 // pred_region
      _
    $region5: #{net_forward.1} parent=1 // pred_fallthru
      _
    // Predicated region
    $region6: #{net_forward.1} parent=1 // pred_check
      _
    $region7: #{net_forward.1} parent=1 // pred_check_branch
      %16 = sbr.rel (0) target = $region9
    $region8: #{net_forward.1} parent=1 // pred_region
      %s18 = ssub.s32 1024, 1024
      %19 = vsyncadd [#allocation3], %s18
      %s20 = sshll.u32 [#allocation2], 4
      %s21 = int_to_ptr.vmem [resolvable:$true] %s20
      %26 = dma.hbm_to_vmem [thread:$0]  %s1, 1024, %s21, [#allocation3], 128, 128, 8
    $region9: #{net_forward.1} parent=1 // pred_fallthru
      _
    // Predicated region
    $region10: #{net_forward.1} parent=1 // pred_check
      _
    $region11: #{net_forward.1} parent=1 // pred_check_branch
      %28 = sbr.rel (0) target = $region13
    $region12: #{net_forward.1} parent=1 // pred_region
      _
    $region13: #{net_forward.1} parent=1 // pred_fallthru
      _
    // Predicated region
    $region14: #{net_forward.1} parent=1 // pred_check
      _
    $region15: #{net_forward.1} parent=1 // pred_check_branch
      %30 = sbr.rel (0) target = $region17
    $region16: #{net_forward.1} parent=1 // pred_region
      %s32 = ssub.s32 2048, 2048
      %33 = vsyncadd [#allocation6], %s32
      %s34 = sshll.u32 [#allocation5], 4
      %s35 = int_to_ptr.vmem [resolvable:$true] %s34
      %40 = dma.hbm_to_vmem [thread:$0]  %s3, 2048, %s35, [#allocation6], 128, 128, 8
    $region17: #{net_forward.1} parent=1 // pred_fallthru
      _
    // Predicated region
    $region18: #{net_forward.1} parent=1 // pred_check
      _
    $region19: #{net_forward.1} parent=1 // pred_check_branch
      %42 = sbr.rel (0) target = $region21
    $region20: #{net_forward.1} parent=1 // pred_region
      _
    $region21: #{net_forward.1} parent=1 // pred_fallthru
      _
    // Predicated region
    $region22: #{net_forward.1} parent=1 // pred_check
      _
    $region23: #{net_forward.1} parent=1 // pred_check_branch
      %44 = sbr.rel (0) target = $region25
    $region24: #{net_forward.1} parent=1 // pred_region
      %45 = dma.done [#allocation3], 1024
    $region25: #{net_forward.1} parent=1 // pred_fallthru
      _
    // Predicated region
    $region26: #{net_forward.1} parent=1 // pred_check
      _
    $region27: #{net_forward.1} parent=1 // pred_check_branch
      %47 = sbr.rel (0) target = $region29
    $region28: #{net_forward.1} parent=1 // pred_region
      %48 = dma.done [#allocation6], 2048
    $region29: #{net_forward.1} parent=1 // pred_fallthru
      _
    %v49 = vld [vmem:[%s0] sm:$0x3]
    %v50 = vld [vmem:[#allocation2] sm:$0xff]
    %v51 = vld [vmem:[#allocation2 + $0x8] sm:$0xff]
    %v52 = vld [vmem:[#allocation2 + $0x10] sm:$0xff]
    %v53 = vld [vmem:[#allocation2 + $0x18] sm:$0xff]
    %v54 = vld [vmem:[#allocation2 + $0x20] sm:$0xff]
    %v55 = vld [vmem:[#allocation2 + $0x28] sm:$0xff]
    %v56 = vld [vmem:[#allocation2 + $0x30] sm:$0xff]
    %v57 = vld [vmem:[#allocation2 + $0x38] sm:$0xff]
    %v58 = vld [vmem:[%s2] sm:$0x1]
    %v60 = vlaneseq
    %v61 = vshrl.u32 %v60, 7
    %v62 = vsub.s32 0, %v61
    %v63 = vrot.slane %v58, %v62
    %vm65 = vcmask 523264
    %v67 = vsel %vm65, %v49, 0
    %69 = vmatprep.subr.mxu0 0.0
    %70 = vmatpush1.msra.mxu0 0.0
    %71 = vmatprep.subr.mxu0 0.0
    %72 = vmatpush1.msra.mxu0 0.0
    %73 = vmatprep.subr.mxu0 0.0
    %74 = vmatpush1.msra.mxu0 0.0
    %75 = vmatprep.subr.mxu0 0.0
    %76 = vmatpush1.msra.mxu0 0.0
    %77 = vmatprep.subr.mxu0 0.0
    %78 = vmatpush1.msra.mxu0 0.0
    %79 = vmatprep.subr.mxu0 0.0
    %80 = vmatpush1.msra.mxu0 0.0
    %81 = vmatprep.subr.mxu0 0.0
    %82 = vmatpush1.msra.mxu0 0.0
    %83 = vmatprep.subr.mxu0 0.0
    %84 = vmatpush1.msra.mxu0 0.0
    %85 = vmatprep.subr.mxu0 0.0
    %86 = vmatpush1.msra.mxu0 %v57
    %87 = vmatprep.subr.mxu0 0.0
    %88 = vmatpush1.msra.mxu0 %v56
    %89 = vmatprep.subr.mxu0 0.0
    %90 = vmatpush1.msra.mxu0 %v55
    %91 = vmatprep.subr.mxu0 0.0
    %92 = vmatpush1.msra.mxu0 %v54
    %93 = vmatprep.subr.mxu0 0.0
    %94 = vmatpush1.msra.mxu0 %v53
    %95 = vmatprep.subr.mxu0 0.0
    %96 = vmatpush1.msra.mxu0 %v52
    %97 = vmatprep.subr.mxu0 0.0
    %98 = vmatpush1.msra.mxu0 %v51
    %99 = vmatprep.subr.mxu0 0.0
    %100 = vmatpush1.msra.mxu0 %v50
    %101 = vmatprep.subr.mxu0 0.0
    %102 = vmatpush2.msra.mxu0 0.0
    %103 = vmatprep.subr.mxu0 0.0
    %104 = vmatpush2.msra.mxu0 0.0
    %105 = vmatprep.subr.mxu0 0.0
    %106 = vmatpush2.msra.mxu0 0.0
    %107 = vmatprep.subr.mxu0 0.0
    %108 = vmatpush2.msra.mxu0 0.0
    %109 = vmatprep.subr.mxu0 0.0
    %110 = vmatpush2.msra.mxu0 0.0
    %111 = vmatprep.subr.mxu0 0.0
    %112 = vmatpush2.msra.mxu0 0.0
    %113 = vmatprep.subr.mxu0 0.0
    %114 = vmatpush2.msra.mxu0 0.0
    %115 = vmatprep.subr.mxu0 0.0
    %116 = vmatpush2.msra.mxu0 0.0
    %117 = vmatprep.subr.mxu0 0.0
    %118 = vmatpush2.msra.mxu0 0.0
    %119 = vmatprep.subr.mxu0 0.0
    %120 = vmatpush2.msra.mxu0 0.0
    %121 = vmatprep.subr.mxu0 0.0
    %122 = vmatpush2.msra.mxu0 0.0
    %123 = vmatprep.subr.mxu0 0.0
    %124 = vmatpush2.msra.mxu0 0.0
    %125 = vmatprep.subr.mxu0 0.0
    %126 = vmatpush2.msra.mxu0 0.0
    %127 = vmatprep.subr.mxu0 0.0
    %128 = vmatpush2.msra.mxu0 0.0
    %129 = vmatprep.subr.mxu0 0.0
    %130 = vmatpush2.msra.mxu0 0.0
    %131 = vmatprep.subr.mxu0 0.0
    %132 = vmatpush2.msra.mxu0 0.0
    %133 = vmatprep.mubr.f32.mxu0 0.0
    %134 = vmatmul.mubr.f32.gmra.mxu0 %v67
    %v135 = vpop.f32.mrf.mxu0
    %v136 = vadd.f32 %v63, %v135
    %v137 = vpop.f32.mrf.mxu0
    %138 = vdwg.mxu0
    %v139 = vmax.f32 %v136, 0.0
    %v140 = vld [vmem:[#allocation5] sm:$0xff]
    %v141 = vld [vmem:[#allocation5 + $0x8] sm:$0xff]
    %v142 = vld [vmem:[#allocation5 + $0x10] sm:$0xff]
    %v143 = vld [vmem:[#allocation5 + $0x18] sm:$0xff]
    %v144 = vld [vmem:[#allocation5 + $0x20] sm:$0xff]
    %v145 = vld [vmem:[#allocation5 + $0x28] sm:$0xff]
    %v146 = vld [vmem:[#allocation5 + $0x30] sm:$0xff]
    %v147 = vld [vmem:[#allocation5 + $0x38] sm:$0xff]
    %v148 = vld [vmem:[#allocation5 + $0x40] sm:$0xff]
    %v149 = vld [vmem:[#allocation5 + $0x48] sm:$0xff]
    %v150 = vld [vmem:[#allocation5 + $0x50] sm:$0xff]
    %v151 = vld [vmem:[#allocation5 + $0x58] sm:$0xff]
    %v152 = vld [vmem:[#allocation5 + $0x60] sm:$0xff]
    %v153 = vld [vmem:[#allocation5 + $0x68] sm:$0xff]
    %v154 = vld [vmem:[#allocation5 + $0x70] sm:$0xff]
    %v155 = vld [vmem:[#allocation5 + $0x78] sm:$0xff]
    %v156 = vld [vmem:[%s4] sm:$0x1]
    %v158 = vlaneseq
    %v159 = vshrl.u32 %v158, 7
    %v160 = vsub.s32 0, %v159
    %v161 = vrot.slane %v156, %v160
    %163 = vmatprep.subr.mxu0 0.0
    %164 = vmatpush1.msra.mxu0 %v155
    %165 = vmatprep.subr.mxu0 0.0
    %166 = vmatpush1.msra.mxu0 %v154
    %167 = vmatprep.subr.mxu0 0.0
    %168 = vmatpush1.msra.mxu0 %v153
    %169 = vmatprep.subr.mxu0 0.0
    %170 = vmatpush1.msra.mxu0 %v152
    %171 = vmatprep.subr.mxu0 0.0
    %172 = vmatpush1.msra.mxu0 %v151
    %173 = vmatprep.subr.mxu0 0.0
    %174 = vmatpush1.msra.mxu0 %v150
    %175 = vmatprep.subr.mxu0 0.0
    %176 = vmatpush1.msra.mxu0 %v149
    %177 = vmatprep.subr.mxu0 0.0
    %178 = vmatpush1.msra.mxu0 %v148
    %179 = vmatprep.subr.mxu0 0.0
    %180 = vmatpush1.msra.mxu0 %v147
    %181 = vmatprep.subr.mxu0 0.0
    %182 = vmatpush1.msra.mxu0 %v146
    %183 = vmatprep.subr.mxu0 0.0
    %184 = vmatpush1.msra.mxu0 %v145
    %185 = vmatprep.subr.mxu0 0.0
    %186 = vmatpush1.msra.mxu0 %v144
    %187 = vmatprep.subr.mxu0 0.0
    %188 = vmatpush1.msra.mxu0 %v143
    %189 = vmatprep.subr.mxu0 0.0
    %190 = vmatpush1.msra.mxu0 %v142
    %191 = vmatprep.subr.mxu0 0.0
    %192 = vmatpush1.msra.mxu0 %v141
    %193 = vmatprep.subr.mxu0 0.0
    %194 = vmatpush1.msra.mxu0 %v140
    %195 = vmatprep.subr.mxu0 0.0
    %196 = vmatpush2.msra.mxu0 0.0
    %197 = vmatprep.subr.mxu0 0.0
    %198 = vmatpush2.msra.mxu0 0.0
    %199 = vmatprep.subr.mxu0 0.0
    %200 = vmatpush2.msra.mxu0 0.0
    %201 = vmatprep.subr.mxu0 0.0
    %202 = vmatpush2.msra.mxu0 0.0
    %203 = vmatprep.subr.mxu0 0.0
    %204 = vmatpush2.msra.mxu0 0.0
    %205 = vmatprep.subr.mxu0 0.0
    %206 = vmatpush2.msra.mxu0 0.0
    %207 = vmatprep.subr.mxu0 0.0
    %208 = vmatpush2.msra.mxu0 0.0
    %209 = vmatprep.subr.mxu0 0.0
    %210 = vmatpush2.msra.mxu0 0.0
    %211 = vmatprep.subr.mxu0 0.0
    %212 = vmatpush2.msra.mxu0 0.0
    %213 = vmatprep.subr.mxu0 0.0
    %214 = vmatpush2.msra.mxu0 0.0
    %215 = vmatprep.subr.mxu0 0.0
    %216 = vmatpush2.msra.mxu0 0.0
    %217 = vmatprep.subr.mxu0 0.0
    %218 = vmatpush2.msra.mxu0 0.0
    %219 = vmatprep.subr.mxu0 0.0
    %220 = vmatpush2.msra.mxu0 0.0
    %221 = vmatprep.subr.mxu0 0.0
    %222 = vmatpush2.msra.mxu0 0.0
    %223 = vmatprep.subr.mxu0 0.0
    %224 = vmatpush2.msra.mxu0 0.0
    %225 = vmatprep.subr.mxu0 0.0
    %226 = vmatpush2.msra.mxu0 0.0
    %227 = vmatprep.mubr.f32.mxu0 0.0
    %228 = vmatmul.mubr.f32.gmra.mxu0 %v139
    %v229 = vpop.f32.mrf.mxu0
    %v230 = vadd.f32 %v161, %v229
    %v231 = vpop.f32.mrf.mxu0
    %232 = vdwg.mxu0
    %233 = vst [vmem:[#allocation7] sm:$0x3] %v230
    // Predicated region
    $region30: #{net_forward.1} parent=1 // pred_check
      _
    $region31: #{net_forward.1} parent=1 // pred_check_branch
      %235 = sbr.rel (0) target = $region33
    $region32: #{net_forward.1} parent=1 // pred_region
      %s237 = ssub.s32 32, 32
      %238 = vsyncadd [#allocation4], %s237
      %s240 = sshll.u32 [#allocation7], 4
      %s241 = int_to_ptr.vmem [resolvable:$true] %s240
      %243 = dma.vmem_to_hbm [thread:$0]  %s241, 32, %s5, [#allocation4]
    $region33: #{net_forward.1} parent=1 // pred_fallthru
      _
    // Predicated region
    $region34: #{net_forward.1} parent=1 // pred_check
      _
    $region35: #{net_forward.1} parent=1 // pred_check_branch
      %245 = sbr.rel (0) target = $region37
    $region36: #{net_forward.1} parent=1 // pred_region
      %246 = dma.done [#allocation4], 32
    $region37: #{net_forward.1} parent=1 // pred_fallthru
      _
    %247 = vsyncpa [#allocation3], 1
    %248 = vsyncpa [#allocation6], 1
    %249 = vsyncpa [#allocation4], 1

</llo_original>
